<compile_context>
chip_gen: v6e
topology: v6e:2x2x1
jax: 0.10.0
libtpu: 0.0.40
codegen_flags: <defaults>
</compile_context>

<pallas_src>
import jax
import jax.numpy as jnp
import numpy as np
from jax.experimental import pallas as pl
from jax.experimental.pallas import tpu as pltpu


def make_seasonality_basis(target_length: int) -> jnp.ndarray:
    """Deterministic, non-trainable basis identical to the PyTorch __init__."""
    half_minus_one = int(target_length / 2 - 1)
    t = jnp.arange(target_length, dtype=jnp.float32) / target_length * 2.0 * np.pi
    i = jnp.arange(1, half_minus_one + 1, dtype=jnp.float32)
    cos_cols = jnp.cos(t[:, None] * i[None, :])           # (T, H)
    sin_cols = jnp.sin(t[:, None] * i[None, :])           # (T, H)
    ones_col = jnp.ones((target_length, 1), jnp.float32)  # (T, 1)
    # torch.stack([ones] + cos + sin, dim=1) -> (T, 1+2H), then .T -> (1+2H, T)
    return jnp.concatenate([ones_col, cos_cols, sin_cols], axis=1).T  # (num_basis, T)


def _round_up(n: int, m: int) -> int:
    return ((n + m - 1) // m) * m


def _seasonality_kernel(x_ref, basis_ref, o_ref):
    # One MXU matmul per (TB, K) x (K, T) tile, f32 accumulation.
    o_ref[...] = jnp.dot(
        x_ref[...], basis_ref[...], preferred_element_type=jnp.float32
    ).astype(o_ref.dtype)


def seasonality_generator(x: jnp.ndarray, basis: jnp.ndarray, *, block_b: int = 4096) -> jnp.ndarray:
    """x: (..., num_basis); basis: (num_basis, T)  ->  (..., T)."""
    *lead, K = x.shape
    K2, T = basis.shape
    assert K == K2, f"dim mismatch: x has {K}, basis has {K2}"

    # torch.matmul promotes against the f32 basis buffer.
    out_dtype = jnp.promote_types(x.dtype, basis.dtype)

    # Flatten leading dims into a single batch axis (torch.matmul broadcast semantics).
    B = int(np.prod(lead)) if lead else 1
    if B == 0:  # degenerate empty batch: nothing to launch
        return jnp.zeros((*lead, T), out_dtype)
    x2 = x.reshape(B, K)

    # Batch tile: single 8-aligned block for small/moderate B; for large B cap the tile
    # so there are >= 2 grid steps (v7x megacore) while staying >= block_b-ish to
    # amortize per-step overhead. No explicit padding of x: Pallas masks the ragged
    # last block's output writes.
    TB = _round_up(B, 8)
    if B >= 2048:
        TB = min(block_b, _round_up(pl.cdiv(B, 2), 8))
    grid = (pl.cdiv(B, TB),)

    out = pl.pallas_call(
        _seasonality_kernel,
        out_shape=jax.ShapeDtypeStruct((B, T), out_dtype),
        grid_spec=pl.GridSpec(
            grid=grid,
            in_specs=[
                pl.BlockSpec((TB, K), lambda i: (i, 0)),  # x: tiled over B (K unpadded)
                pl.BlockSpec((K, T), lambda i: (0, 0)),   # basis: VMEM-resident
            ],
            out_specs=pl.BlockSpec((TB, T), lambda i: (i, 0)),  # lane dim = full T
        ),
        compiler_params=pltpu.CompilerParams(
            dimension_semantics=("parallel",),  # shards batch axis across TCs on v7x
        ),
    )(x2, basis)

    return out.reshape(*lead, T)


if __name__ == "__main__":
    target_length = 32                       # -> half_minus_one = 15, num_basis = 31
    num_basis = 1 + 2 * int(target_length / 2 - 1)

    key = jax.random.PRNGKey(0)
    # Small shapes with leading dims to exercise the (..., num_basis) contract.
    x = jax.random.normal(key, (2, 4, num_basis), dtype=jnp.float32)

    basis = make_seasonality_basis(target_length)            # (31, 32)

    out = seasonality_generator(x, basis)
    out = jax.block_until_ready(out)

    # Reference: plain matmul (same math as torch.matmul(x, self.basis)).
    ref = jnp.matmul(x, basis)
    assert out.shape == (2, 4, target_length)
    np.testing.assert_allclose(np.asarray(out), np.asarray(ref), rtol=1e-5, atol=1e-5)

    print("KERNEL_OK")
</pallas_src>

<mosaic_0001>
module attributes {stable_mosaic.version = 11 : i64} {
  func.func @_seasonality_kernel(%arg0: i32, %arg1: memref<8x31xf32, #tpu.memory_space<vmem>>, %arg2: memref<31x32xf32, #tpu.memory_space<vmem>>, %arg3: memref<8x32xf32, #tpu.memory_space<vmem>>) attributes {dimension_semantics = [#tpu.dimension_semantics<parallel>], iteration_bounds = array<i64: 1>, scalar_prefetch = 0 : i64, scratch_operands = 0 : i64, tpu.core_type = #tpu.core_type<tc>, window_params = [{transform_indices = @transform_0, window_bounds = array<i64: 8, 31>}, {pipeline_mode = #tpu.pipeline_mode<synchronous>, transform_indices = @transform_1, window_bounds = array<i64: 31, 32>}, {transform_indices = @transform_2, window_bounds = array<i64: 8, 32>}]} {
    %c0 = arith.constant 0 : index
    %c0_0 = arith.constant 0 : index
    %0 = vector.load %arg1[%c0, %c0_0] : memref<8x31xf32, #tpu.memory_space<vmem>>, vector<8x31xf32>
    %c0_1 = arith.constant 0 : index
    %c0_2 = arith.constant 0 : index
    %1 = vector.load %arg2[%c0_1, %c0_2] : memref<31x32xf32, #tpu.memory_space<vmem>>, vector<31x32xf32>
    %cst = arith.constant dense<0.000000e+00> : vector<8x32xf32>
    %2 = tpu.matmul %0, %1, %cst {dimension_numbers = #tpu.dot_dimension_numbers<[1], [0], [0], [1], [0, 0, 1, 1], [], []>} : vector<8x31xf32>, vector<31x32xf32>, vector<8x32xf32> -> vector<8x32xf32>
    %c0_3 = arith.constant 0 : index
    %c0_4 = arith.constant 0 : index
    %3 = vector.load %arg3[%c0_3, %c0_4] : memref<8x32xf32, #tpu.memory_space<vmem>>, vector<8x32xf32>
    tpu.vector_store %arg3[%c0_3, %c0_4], %2 {strides = array<i32>} : memref<8x32xf32, #tpu.memory_space<vmem>>, vector<8x32xf32>,
    return
  }
  func.func @transform_0(%arg0: i32) -> (i32, i32) {
    %c0_i32 = arith.constant 0 : i32
    %c0_i32_0 = arith.constant 0 : i32
    return %arg0, %c0_i32 : i32, i32
  }
  func.func @transform_1(%arg0: i32) -> (i32, i32) {
    %c0_i32 = arith.constant 0 : i32
    %c0_i32_0 = arith.constant 0 : i32
    %c0_i32_1 = arith.constant 0 : i32
    return %c0_i32, %c0_i32_0 : i32, i32
  }
  func.func @transform_2(%arg0: i32) -> (i32, i32) {
    %c0_i32 = arith.constant 0 : i32
    %c0_i32_0 = arith.constant 0 : i32
    return %arg0, %c0_i32 : i32, i32
  }
}

</mosaic_0001>

<llo_original>
// kernel: tpu_custom_call.1
$region0: #{tpu_custom_call.1}
  #allocation0 [shape = 'u32[]', space=smem, size = 0x4, offset = 0x4, fixed_abs, tag = 'smem constant byte address 0x4 - core index']
  #allocation1 [shape = 'u32[144,128]{1,0:T(1,128)}', space=vmem, size = 0x12000, scoped, tag = 'internal scratch']
  %s0 = inlined_call_operand.hbm [shape: f32[8,31], index: 0, kind: input, shape index: {}]
  %s1 = inlined_call_operand.hbm [shape: f32[31,32], index: 1, kind: input, shape index: {}]
  %s2 = inlined_call_operand.hbm [shape: f32[8,32], index: 2, kind: output, shape index: {}]
  %s3 = sld [smem:[#allocation0]]
  $region26: #{tpu_custom_call.1} parent=0
    _
  %s5 = ssub.s32 1, %s3
  %s6 = scalar_select 0, %s5, %s3
  $region1: #{tpu_custom_call.1} parent=0
    #allocation2 [shape = 'u8[4096]{0}', space=vmem, size = 0x1000, scoped, tag = 'input window, operand 0, single buffered']
    #allocation3 [shape = 's32[1]{0}', space=sflag, size = 0x4, scoped, tag = 'scoped memory for tpu_custom_call.1']
    #allocation4 [shape = 's32[1]{0}', space=sflag, size = 0x4, scoped, tag = 'scoped memory for tpu_custom_call.1']
    #allocation5 [shape = 'u8[16384]{0}', space=vmem, size = 0x4000, scoped, tag = 'input window, operand 1, single buffered']
    #allocation6 [shape = 's32[1]{0}', space=sflag, size = 0x4, scoped, tag = 'scoped memory for tpu_custom_call.1']
    #allocation7 [shape = 'u8[4096]{0}', space=vmem, size = 0x1000, scoped, tag = 'output window, operand 0, single buffered']
    %7 = vsyncpa [#allocation3], 0
    %8 = vsyncpa [#allocation6], 0
    %9 = vsyncpa [#allocation4], 0
    // Predicated region
    $region2: #{tpu_custom_call.1} parent=1 // pred_check
      _
    $region3: #{tpu_custom_call.1} parent=1 // pred_check_branch
      %11 = sbr.rel (0) target = $region5
    $region4: #{tpu_custom_call.1} parent=1 // pred_region
      %s13 = ssub.s32 128, 128
      %14 = vsyncadd [#allocation3], %s13
      %s16 = sshll.u32 [#allocation2], 4
      %s17 = int_to_ptr.vmem [resolvable:$true] %s16
      %19 = dma.hbm_to_vmem [thread:$0]  %s0, 128, %s17, [#allocation3]
    $region5: #{tpu_custom_call.1} parent=1 // pred_fallthru
      _
    // Predicated region
    $region6: #{tpu_custom_call.1} parent=1 // pred_check
      _
    $region7: #{tpu_custom_call.1} parent=1 // pred_check_branch
      %21 = sbr.rel (0) target = $region9
    $region8: #{tpu_custom_call.1} parent=1 // pred_region
      %s23 = ssub.s32 512, 512
      %24 = vsyncadd [#allocation6], %s23
      %s25 = sshll.u32 [#allocation5], 4
      %s26 = int_to_ptr.vmem [resolvable:$true] %s25
      %31 = dma.hbm_to_vmem [thread:$0]  %s1, 512, %s26, [#allocation6], 128, 128, 8
    $region9: #{tpu_custom_call.1} parent=1 // pred_fallthru
      _
    // Predicated region
    $region10: #{tpu_custom_call.1} parent=1 // pred_check
      _
    $region11: #{tpu_custom_call.1} parent=1 // pred_check_branch
      %33 = sbr.rel (0) target = $region13
    $region12: #{tpu_custom_call.1} parent=1 // pred_region
      %34 = dma.done [#allocation3], 128
    $region13: #{tpu_custom_call.1} parent=1 // pred_fallthru
      _
    // Predicated region
    $region14: #{tpu_custom_call.1} parent=1 // pred_check
      _
    $region15: #{tpu_custom_call.1} parent=1 // pred_check_branch
      %36 = sbr.rel (0) target = $region17
    $region16: #{tpu_custom_call.1} parent=1 // pred_region
      %37 = dma.done [#allocation6], 512
    $region17: #{tpu_custom_call.1} parent=1 // pred_fallthru
      _
    %v38 = vld [vmem:[#allocation2] sm:$0xff]
    %v39 = vld [vmem:[#allocation5] sm:$0xff]
    %v40 = vld [vmem:[#allocation5 + $0x8] sm:$0xff]
    %v41 = vld [vmem:[#allocation5 + $0x10] sm:$0xff]
    %v42 = vld [vmem:[#allocation5 + $0x18] sm:$0x7f]
    %vm43 = vcmask 252928
    %v45 = vsel %vm43, %v38, 0
    %vm47 = vcmask 1046528
    %v49 = vsel %vm47, %v42, 0
    %51 = vmatprep.subr.mxu0 0.0
    %52 = vmatpush1.msra.mxu0 0.0
    %53 = vmatprep.subr.mxu0 0.0
    %54 = vmatpush1.msra.mxu0 0.0
    %55 = vmatprep.subr.mxu0 0.0
    %56 = vmatpush1.msra.mxu0 0.0
    %57 = vmatprep.subr.mxu0 0.0
    %58 = vmatpush1.msra.mxu0 0.0
    %59 = vmatprep.subr.mxu0 0.0
    %60 = vmatpush1.msra.mxu0 0.0
    %61 = vmatprep.subr.mxu0 0.0
    %62 = vmatpush1.msra.mxu0 0.0
    %63 = vmatprep.subr.mxu0 0.0
    %64 = vmatpush1.msra.mxu0 0.0
    %65 = vmatprep.subr.mxu0 0.0
    %66 = vmatpush1.msra.mxu0 0.0
    %67 = vmatprep.subr.mxu0 0.0
    %68 = vmatpush1.msra.mxu0 0.0
    %69 = vmatprep.subr.mxu0 0.0
    %70 = vmatpush1.msra.mxu0 0.0
    %71 = vmatprep.subr.mxu0 0.0
    %72 = vmatpush1.msra.mxu0 0.0
    %73 = vmatprep.subr.mxu0 0.0
    %74 = vmatpush1.msra.mxu0 0.0
    %75 = vmatprep.subr.mxu0 0.0
    %76 = vmatpush1.msra.mxu0 %v49
    %77 = vmatprep.subr.mxu0 0.0
    %78 = vmatpush1.msra.mxu0 %v41
    %79 = vmatprep.subr.mxu0 0.0
    %80 = vmatpush1.msra.mxu0 %v40
    %81 = vmatprep.subr.mxu0 0.0
    %82 = vmatpush1.msra.mxu0 %v39
    %83 = vmatprep.subr.mxu0 0.0
    %84 = vmatpush2.msra.mxu0 0.0
    %85 = vmatprep.subr.mxu0 0.0
    %86 = vmatpush2.msra.mxu0 0.0
    %87 = vmatprep.subr.mxu0 0.0
    %88 = vmatpush2.msra.mxu0 0.0
    %89 = vmatprep.subr.mxu0 0.0
    %90 = vmatpush2.msra.mxu0 0.0
    %91 = vmatprep.subr.mxu0 0.0
    %92 = vmatpush2.msra.mxu0 0.0
    %93 = vmatprep.subr.mxu0 0.0
    %94 = vmatpush2.msra.mxu0 0.0
    %95 = vmatprep.subr.mxu0 0.0
    %96 = vmatpush2.msra.mxu0 0.0
    %97 = vmatprep.subr.mxu0 0.0
    %98 = vmatpush2.msra.mxu0 0.0
    %99 = vmatprep.subr.mxu0 0.0
    %100 = vmatpush2.msra.mxu0 0.0
    %101 = vmatprep.subr.mxu0 0.0
    %102 = vmatpush2.msra.mxu0 0.0
    %103 = vmatprep.subr.mxu0 0.0
    %104 = vmatpush2.msra.mxu0 0.0
    %105 = vmatprep.subr.mxu0 0.0
    %106 = vmatpush2.msra.mxu0 0.0
    %107 = vmatprep.subr.mxu0 0.0
    %108 = vmatpush2.msra.mxu0 0.0
    %109 = vmatprep.subr.mxu0 0.0
    %110 = vmatpush2.msra.mxu0 0.0
    %111 = vmatprep.subr.mxu0 0.0
    %112 = vmatpush2.msra.mxu0 0.0
    %113 = vmatprep.subr.mxu0 0.0
    %114 = vmatpush2.msra.mxu0 0.0
    %115 = vmatprep.mubr.f32.mxu0 0.0
    %116 = vmatmul.mubr.f32.gmra.mxu0 %v45
    %v117 = vpop.f32.mrf.mxu0
    %v118 = vadd.f32 0.0, %v117
    %v119 = vpop.f32.mrf.mxu0
    %120 = vdwg.mxu0
    %vm121 = vcmask 261120
    %122 = vst.msk [vmem:[#allocation7] sm:$0xff] %vm121, %v118
    // Predicated region
    $region18: #{tpu_custom_call.1} parent=1 // pred_check
      _
    $region19: #{tpu_custom_call.1} parent=1 // pred_check_branch
      %124 = sbr.rel (0) target = $region21
    $region20: #{tpu_custom_call.1} parent=1 // pred_region
      %s126 = ssub.s32 128, 128
      %127 = vsyncadd [#allocation4], %s126
      %s129 = sshll.u32 [#allocation7], 4
      %s130 = int_to_ptr.vmem [resolvable:$true] %s129
      %132 = dma.vmem_to_hbm [thread:$0]  %s130, 128, %s2, [#allocation4]
    $region21: #{tpu_custom_call.1} parent=1 // pred_fallthru
      _
    // Predicated region
    $region22: #{tpu_custom_call.1} parent=1 // pred_check
      _
    $region23: #{tpu_custom_call.1} parent=1 // pred_check_branch
      %134 = sbr.rel (0) target = $region25
    $region24: #{tpu_custom_call.1} parent=1 // pred_region
      %135 = dma.done [#allocation4], 128
    $region25: #{tpu_custom_call.1} parent=1 // pred_fallthru
      _
    %136 = vsyncpa [#allocation3], 1
    %137 = vsyncpa [#allocation6], 1
    %138 = vsyncpa [#allocation4], 1

</llo_original>
